<compile_context>
chip_gen: v6e
topology: v6e:2x2x1
jax: 0.10.0
libtpu: 0.0.40
codegen_flags: <defaults>
</compile_context>

<pallas_src>
import functools

import jax
import jax.numpy as jnp
from jax.experimental import pallas as pl
from jax.experimental.pallas import tpu as pltpu


def _round_up(a, m):
    return ((a + m - 1) // m) * m


def autoencoder_kernel(x_ref, w_ref, b_ref, recon_ref, latent_ref):
    """One batch tile of the full autoencoder forward.

    x_ref:      [TB, P]    bf16 (features zero-padded to P lanes)
    w_ref:      [4, P, P]  bf16 (we1, we2, wd1, wd2; zero-padded, pre-transposed: y = x @ W)
    b_ref:      [4, P]     f32  (be1, be2, bd1, bd2; zero-padded)
    recon_ref:  [TB, P]    f32
    latent_ref: [TB, P]    f32
    """
    x = x_ref[...]                       # bf16
    b = b_ref[...]                       # f32

    # ---- encoder: Linear -> ReLU -> Linear ---- (MXU bf16 inputs, f32 accumulation)
    h = jnp.dot(x, w_ref[0], preferred_element_type=jnp.float32) + b[0:1, :]
    h = jnp.maximum(h, 0.0)
    latent = jnp.dot(h.astype(jnp.bfloat16), w_ref[1],
                     preferred_element_type=jnp.float32) + b[1:2, :]

    # ---- decoder: Linear -> ReLU -> Linear ----
    d = jnp.dot(latent.astype(jnp.bfloat16), w_ref[2],
                preferred_element_type=jnp.float32) + b[2:3, :]
    d = jnp.maximum(d, 0.0)
    recon = jnp.dot(d.astype(jnp.bfloat16), w_ref[3],
                    preferred_element_type=jnp.float32) + b[3:4, :]

    latent_ref[...] = latent.astype(latent_ref.dtype)
    recon_ref[...] = recon.astype(recon_ref.dtype)


def timeseries_autoencoder_forward(x, params, max_batch_tile=1024):
    """x: [B, input_dim] float32. params: dict of pre-transposed weights/biases.

    Returns (reconstructed [B, input_dim] f32, latent [B, latent_dim] f32)."""
    B, input_dim = x.shape
    hidden_dim = params["we1"].shape[1]
    latent_dim = params["we2"].shape[1]

    # Lane-dense padded feature width (multiple of 128).
    P = _round_up(max(input_dim, hidden_dim, latent_dim), 128)

    # Pack + zero-pad weights -> [4, P, P] bf16, biases -> [4, P] f32.
    def pad_w(w):
        return jnp.zeros((P, P), jnp.float32).at[: w.shape[0], : w.shape[1]].set(w)

    def pad_b(b):
        return jnp.zeros((P,), jnp.float32).at[: b.shape[-1]].set(b.reshape(-1))

    W = jnp.stack([pad_w(params["we1"]), pad_w(params["we2"]),
                   pad_w(params["wd1"]), pad_w(params["wd2"])]).astype(jnp.bfloat16)
    Bias = jnp.stack([pad_b(params["be1"]), pad_b(params["be2"]),
                      pad_b(params["bd1"]), pad_b(params["bd2"])])  # f32

    # Batch tiling: big tiles (amortize ~0.35us/step), sublane-aligned (multiple of 8).
    TB = min(max_batch_tile, _round_up(B, 8))
    Bp = _round_up(B, TB)
    x_pad = (jnp.zeros((Bp, P), jnp.float32)
             .at[:B, :input_dim].set(x)
             .astype(jnp.bfloat16))

    grid = (Bp // TB,)

    flops = 2 * Bp * P * P * 4
    bytes_accessed = (x_pad.size * 2        # bf16 in
                      + W.size * 2          # bf16 weights (resident)
                      + Bias.size * 4       # f32 biases
                      + 2 * Bp * P * 4)     # two f32 outputs

    recon_p, latent_p = pl.pallas_call(
        autoencoder_kernel,
        out_shape=(jax.ShapeDtypeStruct((Bp, P), jnp.float32),
                   jax.ShapeDtypeStruct((Bp, P), jnp.float32)),
        grid=grid,
        in_specs=[
            pl.BlockSpec((TB, P), lambda i: (i, 0)),        # x: tiled along batch
            pl.BlockSpec((4, P, P), lambda i: (0, 0, 0)),   # weights: VMEM-resident
            pl.BlockSpec((4, P), lambda i: (0, 0)),         # biases: VMEM-resident
        ],
        out_specs=(
            pl.BlockSpec((TB, P), lambda i: (i, 0)),        # recon (lane-dense slab)
            pl.BlockSpec((TB, P), lambda i: (i, 0)),        # latent (lane-dense slab)
        ),
        compiler_params=pltpu.CompilerParams(
            dimension_semantics=("parallel",)),             # 2-TC sharding on v7x
        cost_estimate=pl.CostEstimate(flops=flops, transcendentals=0,
                                      bytes_accessed=bytes_accessed),
    )(x_pad, W, Bias)

    return recon_p[:B, :input_dim], latent_p[:B, :latent_dim]


def init_params(key, input_dim, hidden_dim, latent_dim):
    """PyTorch-Linear-style init U(-1/sqrt(fan_in), 1/sqrt(fan_in)).
    Weights stored pre-transposed as [in_features, out_features]."""
    def linear(key, fan_in, fan_out):
        kw, kb = jax.random.split(key)
        bound = 1.0 / jnp.sqrt(fan_in)
        w = jax.random.uniform(kw, (fan_in, fan_out), jnp.float32, -bound, bound)
        b = jax.random.uniform(kb, (1, fan_out), jnp.float32, -bound, bound)
        return w, b

    k1, k2, k3, k4 = jax.random.split(key, 4)
    we1, be1 = linear(k1, input_dim, hidden_dim)    # encoder Linear 1
    we2, be2 = linear(k2, hidden_dim, latent_dim)   # encoder Linear 2
    wd1, bd1 = linear(k3, latent_dim, hidden_dim)   # decoder Linear 1
    wd2, bd2 = linear(k4, hidden_dim, input_dim)    # decoder Linear 2
    return {"we1": we1, "be1": be1, "we2": we2, "be2": be2,
            "wd1": wd1, "bd1": bd1, "wd2": wd2, "bd2": bd2}


def reference_forward(x, p):
    """Pure-JAX reference mirroring the kernel's bf16-in / f32-accumulate compute path."""
    bf = lambda a: a.astype(jnp.bfloat16)
    dot32 = lambda a, w: jnp.dot(bf(a), bf(w), preferred_element_type=jnp.float32)
    h = jnp.maximum(dot32(x, p["we1"]) + p["be1"], 0.0)
    latent = dot32(h, p["we2"]) + p["be2"]
    d = jnp.maximum(dot32(latent, p["wd1"]) + p["bd1"], 0.0)
    recon = dot32(d, p["wd2"]) + p["bd2"]
    return recon, latent


if __name__ == "__main__":
    input_dim, hidden_dim, latent_dim = 16, 64, 8

    key = jax.random.PRNGKey(0)
    kx, kp, kx2 = jax.random.split(key, 3)
    params = init_params(kp, input_dim, hidden_dim, latent_dim)

    # --- small batch (single grid step) ---
    batch = 8
    x = jax.random.normal(kx, (batch, input_dim), jnp.float32)
    recon, latent = timeseries_autoencoder_forward(x, params)
    jax.block_until_ready((recon, latent))

    recon_ref, latent_ref = reference_forward(x, params)
    assert recon.shape == (batch, input_dim)
    assert latent.shape == (batch, latent_dim)
    assert jnp.allclose(recon, recon_ref, atol=1e-2, rtol=1e-2)
    assert jnp.allclose(latent, latent_ref, atol=1e-2, rtol=1e-2)

    # --- larger batch (exercises multi-step pipelined grid + resident weights) ---
    batch2 = 2048
    x2 = jax.random.normal(kx2, (batch2, input_dim), jnp.float32)
    recon2, latent2 = timeseries_autoencoder_forward(x2, params)
    jax.block_until_ready((recon2, latent2))

    recon2_ref, latent2_ref = reference_forward(x2, params)
    assert recon2.shape == (batch2, input_dim)
    assert latent2.shape == (batch2, latent_dim)
    assert jnp.allclose(recon2, recon2_ref, atol=1e-2, rtol=1e-2)
    assert jnp.allclose(latent2, latent2_ref, atol=1e-2, rtol=1e-2)

    print("KERNEL_OK")
</pallas_src>

<mosaic_0001>
module attributes {stable_mosaic.version = 11 : i64} {
  func.func @autoencoder_kernel(%arg0: i32, %arg1: memref<8x128xbf16, #tpu.memory_space<vmem>>, %arg2: memref<4x128x128xbf16, #tpu.memory_space<vmem>>, %arg3: memref<4x128xf32, #tpu.memory_space<vmem>>, %arg4: memref<8x128xf32, #tpu.memory_space<vmem>>, %arg5: memref<8x128xf32, #tpu.memory_space<vmem>>) attributes {dimension_semantics = [#tpu.dimension_semantics<parallel>], iteration_bounds = array<i64: 1>, scalar_prefetch = 0 : i64, scratch_operands = 0 : i64, tpu.core_type = #tpu.core_type<tc>, window_params = [{transform_indices = @transform_0, window_bounds = array<i64: 8, 128>}, {pipeline_mode = #tpu.pipeline_mode<synchronous>, transform_indices = @transform_1, window_bounds = array<i64: 4, 128, 128>}, {pipeline_mode = #tpu.pipeline_mode<synchronous>, transform_indices = @transform_2, window_bounds = array<i64: 4, 128>}, {transform_indices = @transform_3, window_bounds = array<i64: 8, 128>}, {transform_indices = @transform_4, window_bounds = array<i64: 8, 128>}]} {
    %c0 = arith.constant 0 : index
    %c0_0 = arith.constant 0 : index
    %0 = vector.load %arg1[%c0, %c0_0] : memref<8x128xbf16, #tpu.memory_space<vmem>>, vector<8x128xbf16>
    %c0_1 = arith.constant 0 : index
    %c0_2 = arith.constant 0 : index
    %1 = vector.load %arg3[%c0_1, %c0_2] : memref<4x128xf32, #tpu.memory_space<vmem>>, vector<4x128xf32>
    %c0_3 = arith.constant 0 : index
    %c0_4 = arith.constant 0 : index
    %c0_5 = arith.constant 0 : index
    %2 = vector.load %arg2[%c0_3, %c0_4, %c0_5] : memref<4x128x128xbf16, #tpu.memory_space<vmem>>, vector<1x128x128xbf16>
    %3 = vector.shape_cast %2 : vector<1x128x128xbf16> to vector<128x128xbf16>
    %cst = arith.constant dense<0.000000e+00> : vector<8x128xf32>
    %4 = tpu.matmul %0, %3, %cst {dimension_numbers = #tpu.dot_dimension_numbers<[1], [0], [0], [1], [0, 0, 1, 1], [], []>} : vector<8x128xbf16>, vector<128x128xbf16>, vector<8x128xf32> -> vector<8x128xf32>
    %5 = vector.extract_strided_slice %1 {offsets = [0, 0], sizes = [1, 128], strides = [1, 1]} : vector<4x128xf32> to vector<1x128xf32>
    %6 = vector.broadcast %5 : vector<1x128xf32> to vector<8x128xf32>
    %7 = arith.addf %4, %6 : vector<8x128xf32>
    %cst_6 = arith.constant 0.000000e+00 : f32
    %8 = vector.broadcast %cst_6 : f32 to vector<8x128xf32>
    %9 = arith.maximumf %7, %8 : vector<8x128xf32>
    %10 = arith.truncf %9 : vector<8x128xf32> to vector<8x128xbf16>
    %c1 = arith.constant 1 : index
    %c0_7 = arith.constant 0 : index
    %c0_8 = arith.constant 0 : index
    %11 = vector.load %arg2[%c1, %c0_7, %c0_8] : memref<4x128x128xbf16, #tpu.memory_space<vmem>>, vector<1x128x128xbf16>
    %12 = vector.shape_cast %11 : vector<1x128x128xbf16> to vector<128x128xbf16>
    %cst_9 = arith.constant dense<0.000000e+00> : vector<8x128xf32>
    %13 = tpu.matmul %10, %12, %cst_9 {dimension_numbers = #tpu.dot_dimension_numbers<[1], [0], [0], [1], [0, 0, 1, 1], [], []>} : vector<8x128xbf16>, vector<128x128xbf16>, vector<8x128xf32> -> vector<8x128xf32>
    %14 = vector.extract_strided_slice %1 {offsets = [1, 0], sizes = [1, 128], strides = [1, 1]} : vector<4x128xf32> to vector<1x128xf32>
    %15 = vector.broadcast %14 : vector<1x128xf32> to vector<8x128xf32>
    %16 = arith.addf %13, %15 : vector<8x128xf32>
    %17 = arith.truncf %16 : vector<8x128xf32> to vector<8x128xbf16>
    %c2 = arith.constant 2 : index
    %c0_10 = arith.constant 0 : index
    %c0_11 = arith.constant 0 : index
    %18 = vector.load %arg2[%c2, %c0_10, %c0_11] : memref<4x128x128xbf16, #tpu.memory_space<vmem>>, vector<1x128x128xbf16>
    %19 = vector.shape_cast %18 : vector<1x128x128xbf16> to vector<128x128xbf16>
    %cst_12 = arith.constant dense<0.000000e+00> : vector<8x128xf32>
    %20 = tpu.matmul %17, %19, %cst_12 {dimension_numbers = #tpu.dot_dimension_numbers<[1], [0], [0], [1], [0, 0, 1, 1], [], []>} : vector<8x128xbf16>, vector<128x128xbf16>, vector<8x128xf32> -> vector<8x128xf32>
    %21 = vector.extract_strided_slice %1 {offsets = [2, 0], sizes = [1, 128], strides = [1, 1]} : vector<4x128xf32> to vector<1x128xf32>
    %22 = vector.broadcast %21 : vector<1x128xf32> to vector<8x128xf32>
    %23 = arith.addf %20, %22 : vector<8x128xf32>
    %cst_13 = arith.constant 0.000000e+00 : f32
    %24 = vector.broadcast %cst_13 : f32 to vector<8x128xf32>
    %25 = arith.maximumf %23, %24 : vector<8x128xf32>
    %26 = arith.truncf %25 : vector<8x128xf32> to vector<8x128xbf16>
    %c3 = arith.constant 3 : index
    %c0_14 = arith.constant 0 : index
    %c0_15 = arith.constant 0 : index
    %27 = vector.load %arg2[%c3, %c0_14, %c0_15] : memref<4x128x128xbf16, #tpu.memory_space<vmem>>, vector<1x128x128xbf16>
    %28 = vector.shape_cast %27 : vector<1x128x128xbf16> to vector<128x128xbf16>
    %cst_16 = arith.constant dense<0.000000e+00> : vector<8x128xf32>
    %29 = tpu.matmul %26, %28, %cst_16 {dimension_numbers = #tpu.dot_dimension_numbers<[1], [0], [0], [1], [0, 0, 1, 1], [], []>} : vector<8x128xbf16>, vector<128x128xbf16>, vector<8x128xf32> -> vector<8x128xf32>
    %30 = vector.extract_strided_slice %1 {offsets = [3, 0], sizes = [1, 128], strides = [1, 1]} : vector<4x128xf32> to vector<1x128xf32>
    %31 = vector.broadcast %30 : vector<1x128xf32> to vector<8x128xf32>
    %32 = arith.addf %29, %31 : vector<8x128xf32>
    %c0_17 = arith.constant 0 : index
    %c0_18 = arith.constant 0 : index
    %33 = vector.load %arg5[%c0_17, %c0_18] : memref<8x128xf32, #tpu.memory_space<vmem>>, vector<8x128xf32>
    tpu.vector_store %arg5[%c0_17, %c0_18], %16 {strides = array<i32>} : memref<8x128xf32, #tpu.memory_space<vmem>>, vector<8x128xf32>,
    %c0_19 = arith.constant 0 : index
    %c0_20 = arith.constant 0 : index
    %34 = vector.load %arg4[%c0_19, %c0_20] : memref<8x128xf32, #tpu.memory_space<vmem>>, vector<8x128xf32>
    tpu.vector_store %arg4[%c0_19, %c0_20], %32 {strides = array<i32>} : memref<8x128xf32, #tpu.memory_space<vmem>>, vector<8x128xf32>,
    return
  }
  func.func @transform_0(%arg0: i32) -> (i32, i32) {
    %c0_i32 = arith.constant 0 : i32
    %c0_i32_0 = arith.constant 0 : i32
    return %arg0, %c0_i32 : i32, i32
  }
  func.func @transform_1(%arg0: i32) -> (i32, i32, i32) {
    %c0_i32 = arith.constant 0 : i32
    %c0_i32_0 = arith.constant 0 : i32
    %c0_i32_1 = arith.constant 0 : i32
    %c0_i32_2 = arith.constant 0 : i32
    return %c0_i32, %c0_i32_0, %c0_i32_1 : i32, i32, i32
  }
  func.func @transform_2(%arg0: i32) -> (i32, i32) {
    %c0_i32 = arith.constant 0 : i32
    %c0_i32_0 = arith.constant 0 : i32
    %c0_i32_1 = arith.constant 0 : i32
    return %c0_i32, %c0_i32_0 : i32, i32
  }
  func.func @transform_3(%arg0: i32) -> (i32, i32) {
    %c0_i32 = arith.constant 0 : i32
    %c0_i32_0 = arith.constant 0 : i32
    return %arg0, %c0_i32 : i32, i32
  }
  func.func @transform_4(%arg0: i32) -> (i32, i32) {
    %c0_i32 = arith.constant 0 : i32
    %c0_i32_0 = arith.constant 0 : i32
    return %arg0, %c0_i32 : i32, i32
  }
}

</mosaic_0001>

<llo_original>
// kernel: tpu_custom_call.1
$region0: #{tpu_custom_call.1}
  #allocation0 [shape = 'u32[]', space=smem, size = 0x4, offset = 0x4, fixed_abs, tag = 'smem constant byte address 0x4 - core index']
  #allocation1 [shape = 'u32[144,128]{1,0:T(1,128)}', space=vmem, size = 0x12000, scoped, tag = 'internal scratch']
  %s0 = inlined_call_operand.hbm [shape: bf16[8,128], index: 0, kind: input, shape index: {}]
  %s1 = inlined_call_operand.hbm [shape: bf16[4,128,128], index: 1, kind: input, shape index: {}]
  %s2 = inlined_call_operand.hbm [shape: f32[4,128], index: 2, kind: input, shape index: {}]
  %s3 = inlined_call_operand.hbm [shape: f32[8,128], index: 3, kind: output, shape index: {0}]
  %s4 = inlined_call_operand.hbm [shape: f32[8,128], index: 4, kind: output, shape index: {1}]
  %5 = xla_tuple %s3, %s4
  %s6 = sld [smem:[#allocation0]]
  $region42: #{tpu_custom_call.1} parent=0
    _
  %s8 = ssub.s32 1, %s6
  %s9 = scalar_select 0, %s8, %s6
  $region1: #{tpu_custom_call.1} parent=0
    #allocation2 [shape = 'u8[2048]{0}', space=vmem, size = 0x800, scoped, tag = 'input window, operand 0, single buffered']
    #allocation3 [shape = 's32[1]{0}', space=sflag, size = 0x4, scoped, tag = 'scoped memory for tpu_custom_call.1']
    #allocation4 [shape = 's32[1]{0}', space=sflag, size = 0x4, scoped, tag = 'scoped memory for tpu_custom_call.1']
    #allocation5 [shape = 'u8[131072]{0}', space=vmem, size = 0x20000, scoped, tag = 'input window, operand 1, single buffered']
    #allocation6 [shape = 's32[1]{0}', space=sflag, size = 0x4, scoped, tag = 'scoped memory for tpu_custom_call.1']
    #allocation7 [shape = 'u8[2048]{0}', space=vmem, size = 0x800, scoped, tag = 'input window, operand 2, single buffered']
    #allocation8 [shape = 'u8[4096]{0}', space=vmem, size = 0x1000, scoped, tag = 'output window, operand 0, single buffered']
    #allocation9 [shape = 'u8[4096]{0}', space=vmem, size = 0x1000, scoped, tag = 'output window, operand 1, single buffered']
    #allocation10 [shape = 's32[1]{0}', space=sflag, size = 0x4, scoped, tag = 'scoped memory for tpu_custom_call.1']
    %10 = vsyncpa [#allocation3], 0
    %11 = vsyncpa [#allocation6], 0
    %12 = vsyncpa [#allocation4], 0
    %13 = vsyncpa [#allocation10], 0
    // Predicated region
    $region2: #{tpu_custom_call.1} parent=1 // pred_check
      _
    $region3: #{tpu_custom_call.1} parent=1 // pred_check_branch
      %15 = sbr.rel (0) target = $region5
    $region4: #{tpu_custom_call.1} parent=1 // pred_region
      %s17 = ssub.s32 64, 64
      %18 = vsyncadd [#allocation3], %s17
      %s20 = sshll.u32 [#allocation2], 4
      %s21 = int_to_ptr.vmem [resolvable:$true] %s20
      %23 = dma.hbm_to_vmem [thread:$0]  %s0, 64, %s21, [#allocation3]
    $region5: #{tpu_custom_call.1} parent=1 // pred_fallthru
      _
    // Predicated region
    $region6: #{tpu_custom_call.1} parent=1 // pred_check
      _
    $region7: #{tpu_custom_call.1} parent=1 // pred_check_branch
      %25 = sbr.rel (0) target = $region9
    $region8: #{tpu_custom_call.1} parent=1 // pred_region
      %s27 = ssub.s32 4096, 4096
      %28 = vsyncadd [#allocation6], %s27
      %s29 = sshll.u32 [#allocation5], 4
      %s30 = int_to_ptr.vmem [resolvable:$true] %s29
      %35 = dma.hbm_to_vmem [thread:$0]  %s1, 4096, %s30, [#allocation6], 64, 64, 4
    $region9: #{tpu_custom_call.1} parent=1 // pred_fallthru
      _
    // Predicated region
    $region10: #{tpu_custom_call.1} parent=1 // pred_check
      _
    $region11: #{tpu_custom_call.1} parent=1 // pred_check_branch
      %37 = sbr.rel (0) target = $region13
    $region12: #{tpu_custom_call.1} parent=1 // pred_region
      %s39 = ssub.s32 64, 64
      %40 = vsyncadd [#allocation6], %s39
      %s42 = sshll.u32 [#allocation7], 4
      %s43 = int_to_ptr.vmem [resolvable:$true] %s42
      %45 = dma.hbm_to_vmem [thread:$0]  %s2, 64, %s43, [#allocation6]
    $region13: #{tpu_custom_call.1} parent=1 // pred_fallthru
      _
    // Predicated region
    $region14: #{tpu_custom_call.1} parent=1 // pred_check
      _
    $region15: #{tpu_custom_call.1} parent=1 // pred_check_branch
      %47 = sbr.rel (0) target = $region17
    $region16: #{tpu_custom_call.1} parent=1 // pred_region
      %48 = dma.done [#allocation3], 64
    $region17: #{tpu_custom_call.1} parent=1 // pred_fallthru
      _
    // Predicated region
    $region18: #{tpu_custom_call.1} parent=1 // pred_check
      _
    $region19: #{tpu_custom_call.1} parent=1 // pred_check_branch
      %50 = sbr.rel (0) target = $region21
    $region20: #{tpu_custom_call.1} parent=1 // pred_region
      %51 = dma.done [#allocation6], 4096
    $region21: #{tpu_custom_call.1} parent=1 // pred_fallthru
      _
    // Predicated region
    $region22: #{tpu_custom_call.1} parent=1 // pred_check
      _
    $region23: #{tpu_custom_call.1} parent=1 // pred_check_branch
      %53 = sbr.rel (0) target = $region25
    $region24: #{tpu_custom_call.1} parent=1 // pred_region
      %54 = dma.done [#allocation6], 64
    $region25: #{tpu_custom_call.1} parent=1 // pred_fallthru
      _
    %v56 = vld [vmem:[#allocation2] sm:$0xf]
    %v57 = vld [vmem:[#allocation7] sm:$0xf]
    %v58 = vld [vmem:[#allocation5] sm:$0xf]
    %v59 = vld [vmem:[#allocation5 + $0x4] sm:$0xf]
    %v60 = vld [vmem:[#allocation5 + $0x8] sm:$0xf]
    %v61 = vld [vmem:[#allocation5 + $0xc] sm:$0xf]
    %v62 = vld [vmem:[#allocation5 + $0x10] sm:$0xf]
    %v63 = vld [vmem:[#allocation5 + $0x14] sm:$0xf]
    %v64 = vld [vmem:[#allocation5 + $0x18] sm:$0xf]
    %v65 = vld [vmem:[#allocation5 + $0x1c] sm:$0xf]
    %v66 = vld [vmem:[#allocation5 + $0x20] sm:$0xf]
    %v67 = vld [vmem:[#allocation5 + $0x24] sm:$0xf]
    %v68 = vld [vmem:[#allocation5 + $0x28] sm:$0xf]
    %v69 = vld [vmem:[#allocation5 + $0x2c] sm:$0xf]
    %v70 = vld [vmem:[#allocation5 + $0x30] sm:$0xf]
    %v71 = vld [vmem:[#allocation5 + $0x34] sm:$0xf]
    %v72 = vld [vmem:[#allocation5 + $0x38] sm:$0xf]
    %v73 = vld [vmem:[#allocation5 + $0x3c] sm:$0xf]
    %v74 = vlaneseq
    %v75 = vshrl.u32 %v74, 7
    %v76 = vsub.s32 0, %v75
    %v77 = vrot.slane %v57, %v76
    %v94 = vunpack.c.l.b16 %v58
    %v95 = vunpack.c.l.b16 %v59
    %v96 = vunpack.c.l.b16 %v60
    %v97 = vunpack.c.l.b16 %v61
    %v98 = vunpack.c.l.b16 %v62
    %v99 = vunpack.c.l.b16 %v63
    %v100 = vunpack.c.l.b16 %v64
    %v101 = vunpack.c.l.b16 %v65
    %v102 = vunpack.c.l.b16 %v66
    %v103 = vunpack.c.l.b16 %v67
    %v104 = vunpack.c.l.b16 %v68
    %v105 = vunpack.c.l.b16 %v69
    %v106 = vunpack.c.l.b16 %v70
    %v107 = vunpack.c.l.b16 %v71
    %v108 = vunpack.c.l.b16 %v72
    %v109 = vunpack.c.l.b16 %v73
    %v110 = vpack.c.b16 %v95, %v94
    %v111 = vpack.c.b16 %v97, %v96
    %v112 = vpack.c.b16 %v99, %v98
    %v113 = vpack.c.b16 %v101, %v100
    %v114 = vpack.c.b16 %v103, %v102
    %v115 = vpack.c.b16 %v105, %v104
    %v116 = vpack.c.b16 %v107, %v106
    %v117 = vpack.c.b16 %v109, %v108
    %126 = vmatprep.subr.bf16.mxu0 0
    %127 = vmatpush1.bf16.msra.mxu0 %v117
    %128 = vmatprep.subr.bf16.mxu0 0
    %129 = vmatpush1.bf16.msra.mxu0 %v116
    %130 = vmatprep.subr.bf16.mxu0 0
    %131 = vmatpush1.bf16.msra.mxu0 %v115
    %132 = vmatprep.subr.bf16.mxu0 0
    %133 = vmatpush1.bf16.msra.mxu0 %v114
    %134 = vmatprep.subr.bf16.mxu0 0
    %135 = vmatpush1.bf16.msra.mxu0 %v113
    %136 = vmatprep.subr.bf16.mxu0 0
    %137 = vmatpush1.bf16.msra.mxu0 %v112
    %138 = vmatprep.subr.bf16.mxu0 0
    %139 = vmatpush1.bf16.msra.mxu0 %v111
    %140 = vmatprep.subr.bf16.mxu0 0
    %141 = vmatpush1.bf16.msra.mxu0 %v110
    %142 = vmatprep.subr.bf16.mxu0 0
    %143 = vmatpush2.bf16.msra.mxu0 0
    %144 = vmatprep.subr.bf16.mxu0 0
    %145 = vmatpush2.bf16.msra.mxu0 0
    %146 = vmatprep.subr.bf16.mxu0 0
    %147 = vmatpush2.bf16.msra.mxu0 0
    %148 = vmatprep.subr.bf16.mxu0 0
    %149 = vmatpush2.bf16.msra.mxu0 0
    %150 = vmatprep.subr.bf16.mxu0 0
    %151 = vmatpush2.bf16.msra.mxu0 0
    %152 = vmatprep.subr.bf16.mxu0 0
    %153 = vmatpush2.bf16.msra.mxu0 0
    %154 = vmatprep.subr.bf16.mxu0 0
    %155 = vmatpush2.bf16.msra.mxu0 0
    %156 = vmatprep.subr.bf16.mxu0 0
    %157 = vmatpush2.bf16.msra.mxu0 0
    %158 = vmatprep.mubr.bf16.mxu0 0
    %159 = vmatmul.mubr.bf16.gmra.mxu0 %v56
    %v160 = vpop.f32.mrf.mxu0
    %v161 = vadd.f32 %v77, %v160
    %v162 = vpop.f32.mrf.mxu0
    %v163 = vpop.f32.mrf.mxu0
    %v164 = vpop.f32.mrf.mxu0
    %165 = vdwg.mxu0
    %v166 = vmax.f32 %v161, 0.0
    %v167 = vpack.c.bf16 %v166, %v166
    %s168 = scalar_lea.vmem [#allocation5], 64
    %v169 = vld [vmem:[%s168] sm:$0xf]
    %v170 = vld [vmem:[%s168 + $0x4] sm:$0xf]
    %v171 = vld [vmem:[%s168 + $0x8] sm:$0xf]
    %v172 = vld [vmem:[%s168 + $0xc] sm:$0xf]
    %v173 = vld [vmem:[%s168 + $0x10] sm:$0xf]
    %v174 = vld [vmem:[%s168 + $0x14] sm:$0xf]
    %v175 = vld [vmem:[%s168 + $0x18] sm:$0xf]
    %v176 = vld [vmem:[%s168 + $0x1c] sm:$0xf]
    %v177 = vld [vmem:[%s168 + $0x20] sm:$0xf]
    %v178 = vld [vmem:[%s168 + $0x24] sm:$0xf]
    %v179 = vld [vmem:[%s168 + $0x28] sm:$0xf]
    %v180 = vld [vmem:[%s168 + $0x2c] sm:$0xf]
    %v181 = vld [vmem:[%s168 + $0x30] sm:$0xf]
    %v182 = vld [vmem:[%s168 + $0x34] sm:$0xf]
    %v183 = vld [vmem:[%s168 + $0x38] sm:$0xf]
    %v184 = vld [vmem:[%s168 + $0x3c] sm:$0xf]
    %v185 = vlaneseq
    %v186 = vshrl.u32 %v185, 7
    %v187 = vsub.s32 1, %v186
    %v188 = vrot.slane %v57, %v187
    %v205 = vunpack.c.l.b16 %v169
    %v206 = vunpack.c.l.b16 %v170
    %v207 = vunpack.c.l.b16 %v171
    %v208 = vunpack.c.l.b16 %v172
    %v209 = vunpack.c.l.b16 %v173
    %v210 = vunpack.c.l.b16 %v174
    %v211 = vunpack.c.l.b16 %v175
    %v212 = vunpack.c.l.b16 %v176
    %v213 = vunpack.c.l.b16 %v177
    %v214 = vunpack.c.l.b16 %v178
    %v215 = vunpack.c.l.b16 %v179
    %v216 = vunpack.c.l.b16 %v180
    %v217 = vunpack.c.l.b16 %v181
    %v218 = vunpack.c.l.b16 %v182
    %v219 = vunpack.c.l.b16 %v183
    %v220 = vunpack.c.l.b16 %v184
    %v221 = vpack.c.b16 %v206, %v205
    %v222 = vpack.c.b16 %v208, %v207
    %v223 = vpack.c.b16 %v210, %v209
    %v224 = vpack.c.b16 %v212, %v211
    %v225 = vpack.c.b16 %v214, %v213
    %v226 = vpack.c.b16 %v216, %v215
    %v227 = vpack.c.b16 %v218, %v217
    %v228 = vpack.c.b16 %v220, %v219
    %237 = vmatprep.subr.bf16.mxu0 0
    %238 = vmatpush1.bf16.msra.mxu0 %v228
    %239 = vmatprep.subr.bf16.mxu0 0
    %240 = vmatpush1.bf16.msra.mxu0 %v227
    %241 = vmatprep.subr.bf16.mxu0 0
    %242 = vmatpush1.bf16.msra.mxu0 %v226
    %243 = vmatprep.subr.bf16.mxu0 0
    %244 = vmatpush1.bf16.msra.mxu0 %v225
    %245 = vmatprep.subr.bf16.mxu0 0
    %246 = vmatpush1.bf16.msra.mxu0 %v224
    %247 = vmatprep.subr.bf16.mxu0 0
    %248 = vmatpush1.bf16.msra.mxu0 %v223
    %249 = vmatprep.subr.bf16.mxu0 0
    %250 = vmatpush1.bf16.msra.mxu0 %v222
    %251 = vmatprep.subr.bf16.mxu0 0
    %252 = vmatpush1.bf16.msra.mxu0 %v221
    %253 = vmatprep.subr.bf16.mxu0 0
    %254 = vmatpush2.bf16.msra.mxu0 0
    %255 = vmatprep.subr.bf16.mxu0 0
    %256 = vmatpush2.bf16.msra.mxu0 0
    %257 = vmatprep.subr.bf16.mxu0 0
    %258 = vmatpush2.bf16.msra.mxu0 0
    %259 = vmatprep.subr.bf16.mxu0 0
    %260 = vmatpush2.bf16.msra.mxu0 0
    %261 = vmatprep.subr.bf16.mxu0 0
    %262 = vmatpush2.bf16.msra.mxu0 0
    %263 = vmatprep.subr.bf16.mxu0 0
    %264 = vmatpush2.bf16.msra.mxu0 0
    %265 = vmatprep.subr.bf16.mxu0 0
    %266 = vmatpush2.bf16.msra.mxu0 0
    %267 = vmatprep.subr.bf16.mxu0 0
    %268 = vmatpush2.bf16.msra.mxu0 0
    %269 = vmatprep.mubr.bf16.mxu0 0
    %270 = vmatmul.mubr.bf16.gmra.mxu0 %v167
    %v271 = vpop.f32.mrf.mxu0
    %v272 = vadd.f32 %v188, %v271
    %v273 = vpop.f32.mrf.mxu0
    %v274 = vpop.f32.mrf.mxu0
    %v275 = vpop.f32.mrf.mxu0
    %276 = vdwg.mxu0
    %v277 = vpack.c.bf16 %v272, %v272
    %s278 = scalar_lea.vmem [#allocation5], 128
    %v279 = vld [vmem:[%s278] sm:$0xf]
    %v280 = vld [vmem:[%s278 + $0x4] sm:$0xf]
    %v281 = vld [vmem:[%s278 + $0x8] sm:$0xf]
    %v282 = vld [vmem:[%s278 + $0xc] sm:$0xf]
    %v283 = vld [vmem:[%s278 + $0x10] sm:$0xf]
    %v284 = vld [vmem:[%s278 + $0x14] sm:$0xf]
    %v285 = vld [vmem:[%s278 + $0x18] sm:$0xf]
    %v286 = vld [vmem:[%s278 + $0x1c] sm:$0xf]
    %v287 = vld [vmem:[%s278 + $0x20] sm:$0xf]
    %v288 = vld [vmem:[%s278 + $0x24] sm:$0xf]
    %v289 = vld [vmem:[%s278 + $0x28] sm:$0xf]
    %v290 = vld [vmem:[%s278 + $0x2c] sm:$0xf]
    %v291 = vld [vmem:[%s278 + $0x30] sm:$0xf]
    %v292 = vld [vmem:[%s278 + $0x34] sm:$0xf]
    %v293 = vld [vmem:[%s278 + $0x38] sm:$0xf]
    %v294 = vld [vmem:[%s278 + $0x3c] sm:$0xf]
    %v295 = vlaneseq
    %v296 = vshrl.u32 %v295, 7
    %v297 = vsub.s32 2, %v296
    %v298 = vrot.slane %v57, %v297
    %v315 = vunpack.c.l.b16 %v279
    %v316 = vunpack.c.l.b16 %v280
    %v317 = vunpack.c.l.b16 %v281
    %v318 = vunpack.c.l.b16 %v282
    %v319 = vunpack.c.l.b16 %v283
    %v320 = vunpack.c.l.b16 %v284
    %v321 = vunpack.c.l.b16 %v285
    %v322 = vunpack.c.l.b16 %v286
    %v323 = vunpack.c.l.b16 %v287
    %v324 = vunpack.c.l.b16 %v288
    %v325 = vunpack.c.l.b16 %v289
    %v326 = vunpack.c.l.b16 %v290
    %v327 = vunpack.c.l.b16 %v291
    %v328 = vunpack.c.l.b16 %v292
    %v329 = vunpack.c.l.b16 %v293
    %v330 = vunpack.c.l.b16 %v294
    %v331 = vpack.c.b16 %v316, %v315
    %v332 = vpack.c.b16 %v318, %v317
    %v333 = vpack.c.b16 %v320, %v319
    %v334 = vpack.c.b16 %v322, %v321
    %v335 = vpack.c.b16 %v324, %v323
    %v336 = vpack.c.b16 %v326, %v325
    %v337 = vpack.c.b16 %v328, %v327
    %v338 = vpack.c.b16 %v330, %v329
    %347 = vmatprep.subr.bf16.mxu0 0
    %348 = vmatpush1.bf16.msra.mxu0 %v338
    %349 = vmatprep.subr.bf16.mxu0 0
    %350 = vmatpush1.bf16.msra.mxu0 %v337
    %351 = vmatprep.subr.bf16.mxu0 0
    %352 = vmatpush1.bf16.msra.mxu0 %v336
    %353 = vmatprep.subr.bf16.mxu0 0
    %354 = vmatpush1.bf16.msra.mxu0 %v335
    %355 = vmatprep.subr.bf16.mxu0 0
    %356 = vmatpush1.bf16.msra.mxu0 %v334
    %357 = vmatprep.subr.bf16.mxu0 0
    %358 = vmatpush1.bf16.msra.mxu0 %v333
    %359 = vmatprep.subr.bf16.mxu0 0
    %360 = vmatpush1.bf16.msra.mxu0 %v332
    %361 = vmatprep.subr.bf16.mxu0 0
    %362 = vmatpush1.bf16.msra.mxu0 %v331
    %363 = vmatprep.subr.bf16.mxu0 0
    %364 = vmatpush2.bf16.msra.mxu0 0
    %365 = vmatprep.subr.bf16.mxu0 0
    %366 = vmatpush2.bf16.msra.mxu0 0
    %367 = vmatprep.subr.bf16.mxu0 0
    %368 = vmatpush2.bf16.msra.mxu0 0
    %369 = vmatprep.subr.bf16.mxu0 0
    %370 = vmatpush2.bf16.msra.mxu0 0
    %371 = vmatprep.subr.bf16.mxu0 0
    %372 = vmatpush2.bf16.msra.mxu0 0
    %373 = vmatprep.subr.bf16.mxu0 0
    %374 = vmatpush2.bf16.msra.mxu0 0
    %375 = vmatprep.subr.bf16.mxu0 0
    %376 = vmatpush2.bf16.msra.mxu0 0
    %377 = vmatprep.subr.bf16.mxu0 0
    %378 = vmatpush2.bf16.msra.mxu0 0
    %379 = vmatprep.mubr.bf16.mxu0 0
    %380 = vmatmul.mubr.bf16.gmra.mxu0 %v277
    %v381 = vpop.f32.mrf.mxu0
    %v382 = vadd.f32 %v298, %v381
    %v383 = vpop.f32.mrf.mxu0
    %v384 = vpop.f32.mrf.mxu0
    %v385 = vpop.f32.mrf.mxu0
    %386 = vdwg.mxu0
    %v387 = vmax.f32 %v382, 0.0
    %v388 = vpack.c.bf16 %v387, %v387
    %s389 = scalar_lea.vmem [#allocation5], 192
    %v390 = vld [vmem:[%s389] sm:$0xf]
    %v391 = vld [vmem:[%s389 + $0x4] sm:$0xf]
    %v392 = vld [vmem:[%s389 + $0x8] sm:$0xf]
    %v393 = vld [vmem:[%s389 + $0xc] sm:$0xf]
    %v394 = vld [vmem:[%s389 + $0x10] sm:$0xf]
    %v395 = vld [vmem:[%s389 + $0x14] sm:$0xf]
    %v396 = vld [vmem:[%s389 + $0x18] sm:$0xf]
    %v397 = vld [vmem:[%s389 + $0x1c] sm:$0xf]
    %v398 = vld [vmem:[%s389 + $0x20] sm:$0xf]
    %v399 = vld [vmem:[%s389 + $0x24] sm:$0xf]
    %v400 = vld [vmem:[%s389 + $0x28] sm:$0xf]
    %v401 = vld [vmem:[%s389 + $0x2c] sm:$0xf]
    %v402 = vld [vmem:[%s389 + $0x30] sm:$0xf]
    %v403 = vld [vmem:[%s389 + $0x34] sm:$0xf]
    %v404 = vld [vmem:[%s389 + $0x38] sm:$0xf]
    %v405 = vld [vmem:[%s389 + $0x3c] sm:$0xf]
    %v406 = vlaneseq
    %v407 = vshrl.u32 %v406, 7
    %v408 = vsub.s32 3, %v407
    %v409 = vrot.slane %v57, %v408
    %v426 = vunpack.c.l.b16 %v390
    %v427 = vunpack.c.l.b16 %v391
    %v428 = vunpack.c.l.b16 %v392
    %v429 = vunpack.c.l.b16 %v393
    %v430 = vunpack.c.l.b16 %v394
    %v431 = vunpack.c.l.b16 %v395
    %v432 = vunpack.c.l.b16 %v396
    %v433 = vunpack.c.l.b16 %v397
    %v434 = vunpack.c.l.b16 %v398
    %v435 = vunpack.c.l.b16 %v399
    %v436 = vunpack.c.l.b16 %v400
    %v437 = vunpack.c.l.b16 %v401
    %v438 = vunpack.c.l.b16 %v402
    %v439 = vunpack.c.l.b16 %v403
    %v440 = vunpack.c.l.b16 %v404
    %v441 = vunpack.c.l.b16 %v405
    %v442 = vpack.c.b16 %v427, %v426
    %v443 = vpack.c.b16 %v429, %v428
    %v444 = vpack.c.b16 %v431, %v430
    %v445 = vpack.c.b16 %v433, %v432
    %v446 = vpack.c.b16 %v435, %v434
    %v447 = vpack.c.b16 %v437, %v436
    %v448 = vpack.c.b16 %v439, %v438
    %v449 = vpack.c.b16 %v441, %v440
    %458 = vmatprep.subr.bf16.mxu0 0
    %459 = vmatpush1.bf16.msra.mxu0 %v449
    %460 = vmatprep.subr.bf16.mxu0 0
    %461 = vmatpush1.bf16.msra.mxu0 %v448
    %462 = vmatprep.subr.bf16.mxu0 0
    %463 = vmatpush1.bf16.msra.mxu0 %v447
    %464 = vmatprep.subr.bf16.mxu0 0
    %465 = vmatpush1.bf16.msra.mxu0 %v446
    %466 = vmatprep.subr.bf16.mxu0 0
    %467 = vmatpush1.bf16.msra.mxu0 %v445
    %468 = vmatprep.subr.bf16.mxu0 0
    %469 = vmatpush1.bf16.msra.mxu0 %v444
    %470 = vmatprep.subr.bf16.mxu0 0
    %471 = vmatpush1.bf16.msra.mxu0 %v443
    %472 = vmatprep.subr.bf16.mxu0 0
    %473 = vmatpush1.bf16.msra.mxu0 %v442
    %474 = vmatprep.subr.bf16.mxu0 0
    %475 = vmatpush2.bf16.msra.mxu0 0
    %476 = vmatprep.subr.bf16.mxu0 0
    %477 = vmatpush2.bf16.msra.mxu0 0
    %478 = vmatprep.subr.bf16.mxu0 0
    %479 = vmatpush2.bf16.msra.mxu0 0
    %480 = vmatprep.subr.bf16.mxu0 0
    %481 = vmatpush2.bf16.msra.mxu0 0
    %482 = vmatprep.subr.bf16.mxu0 0
    %483 = vmatpush2.bf16.msra.mxu0 0
    %484 = vmatprep.subr.bf16.mxu0 0
    %485 = vmatpush2.bf16.msra.mxu0 0
    %486 = vmatprep.subr.bf16.mxu0 0
    %487 = vmatpush2.bf16.msra.mxu0 0
    %488 = vmatprep.subr.bf16.mxu0 0
    %489 = vmatpush2.bf16.msra.mxu0 0
    %490 = vmatprep.mubr.bf16.mxu0 0
    %491 = vmatmul.mubr.bf16.gmra.mxu0 %v388
    %v492 = vpop.f32.mrf.mxu0
    %v493 = vadd.f32 %v409, %v492
    %v494 = vpop.f32.mrf.mxu0
    %v495 = vpop.f32.mrf.mxu0
    %v496 = vpop.f32.mrf.mxu0
    %497 = vdwg.mxu0
    %498 = vst [vmem:[#allocation9] sm:$0xff] %v272
    %499 = vst [vmem:[#allocation8] sm:$0xff] %v493
    // Predicated region
    $region26: #{tpu_custom_call.1} parent=1 // pred_check
      _
    $region27: #{tpu_custom_call.1} parent=1 // pred_check_branch
      %501 = sbr.rel (0) target = $region29
    $region28: #{tpu_custom_call.1} parent=1 // pred_region
      %s503 = ssub.s32 128, 128
      %504 = vsyncadd [#allocation4], %s503
      %s506 = sshll.u32 [#allocation8], 4
      %s507 = int_to_ptr.vmem [resolvable:$true] %s506
      %509 = dma.vmem_to_hbm [thread:$0]  %s507, 128, %s3, [#allocation4]
    $region29: #{tpu_custom_call.1} parent=1 // pred_fallthru
      _
    // Predicated region
    $region30: #{tpu_custom_call.1} parent=1 // pred_check
      _
    $region31: #{tpu_custom_call.1} parent=1 // pred_check_branch
      %511 = sbr.rel (0) target = $region33
    $region32: #{tpu_custom_call.1} parent=1 // pred_region
      %s513 = ssub.s32 128, 128
      %514 = vsyncadd [#allocation10], %s513
      %s516 = sshll.u32 [#allocation9], 4
      %s517 = int_to_ptr.vmem [resolvable:$true] %s516
      %519 = dma.vmem_to_hbm [thread:$0]  %s517, 128, %s4, [#allocation10]
    $region33: #{tpu_custom_call.1} parent=1 // pred_fallthru
      _
    // Predicated region
    $region34: #{tpu_custom_call.1} parent=1 // pred_check
      _
    $region35: #{tpu_custom_call.1} parent=1 // pred_check_branch
      %521 = sbr.rel (0) target = $region37
    $region36: #{tpu_custom_call.1} parent=1 // pred_region
      %522 = dma.done [#allocation4], 128
    $region37: #{tpu_custom_call.1} parent=1 // pred_fallthru
      _
    // Predicated region
    $region38: #{tpu_custom_call.1} parent=1 // pred_check
      _
    $region39: #{tpu_custom_call.1} parent=1 // pred_check_branch
      %524 = sbr.rel (0) target = $region41
    $region40: #{tpu_custom_call.1} parent=1 // pred_region
      %525 = dma.done [#allocation10], 128
    $region41: #{tpu_custom_call.1} parent=1 // pred_fallthru
      _
    %526 = vsyncpa [#allocation3], 1
    %527 = vsyncpa [#allocation6], 1
    %528 = vsyncpa [#allocation4], 1
    %529 = vsyncpa [#allocation10], 1

</llo_original>
